<compile_context>
chip_gen: v7x
topology: tpu7x:2x2x1
jax: 0.10.0
libtpu: 0.0.40
codegen_flags: <defaults>
</compile_context>

<pallas_src>
import functools

import jax
import jax.numpy as jnp
from jax.experimental import pallas as pl
from jax.experimental.pallas import tpu as pltpu


def _round_up(x, m):
    return (x + m - 1) // m * m


def _vmem_capacity_bytes():
    """Physical VMEM of the local TPU generation (conservative fallback)."""
    try:
        info = pltpu.get_tpu_info()
        cap = getattr(info, "vmem_capacity_bytes", None)
        if cap:
            return int(cap)
    except Exception:
        pass
    return 64 << 20  # assume the smallest (v7x-sized) VMEM if unknown


def _vmem_budget():
    """(fused-path footprint cap, scoped-VMEM ceiling, fallback tile bytes)."""
    cap = _vmem_capacity_bytes()
    if cap >= (96 << 20):            # v5e / v6e: 128 MiB physical VMEM
        return 88 << 20, 100 << 20, 4 << 20
    # v7x: 64 MiB physical VMEM -- leave headroom for Mosaic internal scratch.
    return 26 << 20, 48 << 20, 2 << 20


def _vmem_limit(needed_bytes, ceiling):
    # Never drop below the default scoped-VMEM limit; never exceed the
    # generation-specific ceiling.
    return int(min(max(needed_bytes, 32 << 20), ceiling))


def _min_value(dtype):
    """Identity element for max in the given dtype (dtype-aware sentinel)."""
    dtype = jnp.dtype(dtype)
    if jnp.issubdtype(dtype, jnp.floating):
        return jnp.asarray(-jnp.inf, dtype)
    return jnp.asarray(jnp.iinfo(dtype).min, dtype)


def _fused_mlp_scale(pooled, w1, b1, w2, b2):
    """pooled: (C, 2) f32, columns = [avg, max] -> (C, 1) sigmoid scale."""
    h = jnp.dot(w1, pooled, preferred_element_type=jnp.float32) + b1      # (Cr, 2)
    h = jnp.maximum(h, 0.0)
    y = jnp.dot(w2, h, preferred_element_type=jnp.float32) + b2           # (C, 2)
    # sum of the two columns == fc2(relu(fc1(avg))) + fc2(relu(fc1(max)))
    return jax.nn.sigmoid(jnp.sum(y, axis=-1, keepdims=True))             # (C, 1)


# ---------------------------------------------------------------------------
# Fast path: one (C, HW) slab per batch element; pool + MLP + scale fused.
# ---------------------------------------------------------------------------
def _channel_attention_fused_kernel(x_ref, w1_ref, b1_ref, w2_ref, b2_ref,
                                    o_ref, *, hw):
    x = x_ref[0]                                           # (C, HW), native dtype
    C = x.shape[0]
    aligned = (hw // 128) * 128                            # lane-aligned prefix
    rem = hw - aligned

    if rem == 0:
        ssum = jnp.sum(x.astype(jnp.float32), axis=-1, keepdims=True)
        mx = jnp.max(x, axis=-1, keepdims=True).astype(jnp.float32)
    elif aligned == 0:
        # Whole row is a single ragged (<128-lane) chunk.
        lane = jax.lax.broadcasted_iota(jnp.int32, x.shape, 1)
        valid = lane < hw
        ssum = jnp.sum(jnp.where(valid, x.astype(jnp.float32), 0.0),
                       axis=-1, keepdims=True)
        mx = jnp.max(jnp.where(valid, x, _min_value(x.dtype)),
                     axis=-1, keepdims=True).astype(jnp.float32)
    else:
        # Unmasked reductions over the aligned prefix; mask only the tail
        # column so no slab-sized masked temporary is materialized.
        head = x[:, :aligned]
        ssum = jnp.sum(head.astype(jnp.float32), axis=-1, keepdims=True)
        mx = jnp.max(head, axis=-1, keepdims=True).astype(jnp.float32)

        tail = x[:, aligned:]                              # (C, rem), rem < 128
        lane = jax.lax.broadcasted_iota(jnp.int32, tail.shape, 1)
        valid = lane < rem
        ssum = ssum + jnp.sum(jnp.where(valid, tail.astype(jnp.float32), 0.0),
                              axis=-1, keepdims=True)
        mx = jnp.maximum(
            mx,
            jnp.max(jnp.where(valid, tail, _min_value(tail.dtype)),
                    axis=-1, keepdims=True).astype(jnp.float32))

    avg = ssum * (1.0 / hw)

    # Stack [avg | max] -> (C, 2): the shared MLP becomes two small GEMMs.
    col = jax.lax.broadcasted_iota(jnp.int32, (C, 2), 1)
    pooled = jnp.where(col == 0, avg, mx)                  # (C, 2)

    scale = _fused_mlp_scale(pooled, w1_ref[...], b1_ref[...],
                             w2_ref[...], b2_ref[...])     # (C, 1)

    # Apply in the input's native dtype: 1x slab read + 1x slab write.
    o_ref[0] = x * scale.astype(o_ref.dtype)


# ---------------------------------------------------------------------------
# Fallback pass 1: pooling only (sum + max) over (C-tile, HW-tile) blocks.
# ---------------------------------------------------------------------------
def _pool_kernel(x_ref, pooled_ref, sum_acc, max_acc, *, hw, hw_tile):
    t = pl.program_id(2)
    n_t = pl.num_programs(2)

    @pl.when(t == 0)
    def _():
        sum_acc[...] = jnp.zeros_like(sum_acc)
        max_acc[...] = jnp.full(max_acc.shape, -jnp.inf, dtype=max_acc.dtype)

    def _update_unmasked():
        x = x_ref[0]                                       # (c_tile, hw_tile)
        sum_acc[...] += jnp.sum(x.astype(jnp.float32), axis=-1, keepdims=True)
        max_acc[...] = jnp.maximum(
            max_acc[...],
            jnp.max(x, axis=-1, keepdims=True).astype(jnp.float32))

    def _update_masked_tail():
        # Last HW tile: lanes past `hw` contain garbage (no HBM-side padding).
        x = x_ref[0]
        lane = jax.lax.broadcasted_iota(jnp.int32, x.shape, 1) + t * hw_tile
        valid = lane < hw
        sum_acc[...] += jnp.sum(jnp.where(valid, x.astype(jnp.float32), 0.0),
                                axis=-1, keepdims=True)
        max_acc[...] = jnp.maximum(
            max_acc[...],
            jnp.max(jnp.where(valid, x, _min_value(x.dtype)),
                    axis=-1, keepdims=True).astype(jnp.float32))

    if hw % hw_tile != 0:
        pl.when(t < n_t - 1)(_update_unmasked)      # steady state: no mask cost
        pl.when(t == n_t - 1)(_update_masked_tail)  # only the tail tile masks
    else:
        _update_unmasked()

    @pl.when(t == n_t - 1)
    def _():
        col = jax.lax.broadcasted_iota(jnp.int32, pooled_ref.shape[1:], 1)
        pooled_ref[0] = jnp.where(col == 0, sum_acc[...], max_acc[...])


# ---------------------------------------------------------------------------
# Fallback pass 2: tiled elementwise per-channel scaling.
# ---------------------------------------------------------------------------
def _apply_scale_kernel(x_ref, scale_ref, o_ref):
    o_ref[0] = x_ref[0] * scale_ref[0].astype(o_ref.dtype)


def channel_attention(x_nchw, w1, b1, w2, b2, *,
                      single_pass_vmem_cap=None,
                      hw_tile=None, c_tile=None):
    """CBAM ChannelAttention forward.

    x_nchw: (B, C, H, W); w1: (C//r, C); b1: (C//r,); w2: (C, C//r); b2: (C,).
    """
    B, C, H, W = x_nchw.shape
    Cr = w1.shape[0]
    HW = H * W
    itemsize = jnp.dtype(x_nchw.dtype).itemsize

    default_cap, limit_ceiling, target_tile_bytes = _vmem_budget()
    if single_pass_vmem_cap is None:
        single_pass_vmem_cap = default_cap

    # The tiny shared MLP always runs in f32 regardless of activation dtype.
    w1f = w1.astype(jnp.float32)
    w2f = w2.astype(jnp.float32)
    b1f = b1.reshape(Cr, 1).astype(jnp.float32)
    b2f = b2.reshape(C, 1).astype(jnp.float32)
    wbytes = (Cr * C + Cr + C * Cr + C) * 4

    x_flat = x_nchw.reshape(B, C, HW)

    # Fused footprint: in/out slabs double-buffered + one f32 reduction temp
    # (the astype(f32) feeding the sum) + weights + headroom.  VMEM buffers
    # round up to (8, 128) tiles even without HBM-side padding.
    c_pad = _round_up(C, 8)
    hw_lane_pad = _round_up(HW, 128)
    slab = c_pad * hw_lane_pad * itemsize
    fused_vmem = 4 * slab + c_pad * hw_lane_pad * 4 + 4 * wbytes + (2 << 20)

    if fused_vmem <= single_pass_vmem_cap:
        # -------- fast path: one (C, HW) slab per batch element, 1R + 1W ----
        # TODO(synk): for B == 1 the slab's DMA-in / compute / DMA-out cannot
        # overlap; an inner emit_pipeline over HW would recover that case.
        cost = pl.CostEstimate(
            flops=int(3 * B * C * HW + 8 * B * C * Cr),
            transcendentals=int(B * C),
            bytes_accessed=int(2 * B * C * HW * itemsize + B * wbytes),
        )
        kernel = functools.partial(_channel_attention_fused_kernel, hw=HW)
        out = pl.pallas_call(
            kernel,
            out_shape=jax.ShapeDtypeStruct((B, C, HW), x_nchw.dtype),
            grid_spec=pltpu.PrefetchScalarGridSpec(
                num_scalar_prefetch=0,
                grid=(B,),
                in_specs=[
                    pl.BlockSpec((1, C, HW), lambda b: (b, 0, 0)),
                    pl.BlockSpec((Cr, C), lambda b: (0, 0)),
                    pl.BlockSpec((Cr, 1), lambda b: (0, 0)),
                    pl.BlockSpec((C, Cr), lambda b: (0, 0)),
                    pl.BlockSpec((C, 1), lambda b: (0, 0)),
                ],
                out_specs=pl.BlockSpec((1, C, HW), lambda b: (b, 0, 0)),
            ),
            compiler_params=pltpu.CompilerParams(
                dimension_semantics=("parallel",),
                vmem_limit_bytes=_vmem_limit(fused_vmem, limit_ceiling),
            ),
            cost_estimate=cost,
        )(x_flat, w1f, b1f, w2f, b2f)
        return out.reshape(B, C, H, W)

    # -------- fallback: (B, C-tile, HW-tile) two-pass (slab > VMEM cap) -----
    if c_tile is None:
        c_tile = C if C <= 512 else 512
    else:
        c_tile = min(int(c_tile), C)
        if c_tile != C:
            c_tile = max(8, (c_tile // 8) * 8)
    if hw_tile is None:
        # Size the tile by bytes so the pipeline hits HBM roofline.
        lanes = max(128, target_tile_bytes // max(1, c_tile * itemsize))
        hw_tile = max(512, (lanes // 128) * 128)
    else:
        hw_tile = max(128, (int(hw_tile) // 128) * 128)
    hw_tile = min(hw_tile, _round_up(HW, 128))

    n_c = pl.cdiv(C, c_tile)
    n_hw = pl.cdiv(HW, hw_tile)
    c_tile_pad = _round_up(c_tile, 8)
    tile_in = c_tile_pad * hw_tile * itemsize
    tile_f32 = c_tile_pad * hw_tile * 4

    # Pass 1: pooling only -> (B, C, 2) [sum, max] in f32.
    pool_cost = pl.CostEstimate(
        flops=int(2 * B * C * HW),
        transcendentals=0,
        bytes_accessed=int(B * C * HW * itemsize + B * C * 2 * 4),
    )
    pool_kernel = functools.partial(_pool_kernel, hw=HW, hw_tile=hw_tile)
    pooled = pl.pallas_call(
        pool_kernel,
        out_shape=jax.ShapeDtypeStruct((B, C, 2), jnp.float32),
        grid_spec=pltpu.PrefetchScalarGridSpec(
            num_scalar_prefetch=0,
            grid=(B, n_c, n_hw),
            in_specs=[pl.BlockSpec((1, c_tile, hw_tile),
                                   lambda b, c, t: (b, c, t))],
            out_specs=pl.BlockSpec((1, c_tile, 2), lambda b, c, t: (b, c, 0)),
            scratch_shapes=[pltpu.VMEM((c_tile, 1), jnp.float32),
                            pltpu.VMEM((c_tile, 1), jnp.float32)],
        ),
        compiler_params=pltpu.CompilerParams(
            dimension_semantics=("parallel", "parallel", "arbitrary"),
            vmem_limit_bytes=_vmem_limit(
                2 * tile_in + 2 * tile_f32 + (4 << 20), limit_ceiling),
        ),
        cost_estimate=pool_cost,
    )(x_flat)

    # Tiny shared MLP + sigmoid on (B, C) pooled values in plain JAX
    # (negligible flops; keeps the MLP weights out of the pooling pipeline).
    avg = pooled[..., 0] * (1.0 / HW)                      # (B, C)
    mx = pooled[..., 1]                                    # (B, C)

    def _mlp(v):
        h = jnp.maximum(v @ w1f.T + b1f[:, 0], 0.0)
        return h @ w2f.T + b2f[:, 0]

    scale = jax.nn.sigmoid(_mlp(avg) + _mlp(mx))[..., None]  # (B, C, 1) f32

    # Pass 2: apply the per-channel scale with a fully parallel grid.
    apply_cost = pl.CostEstimate(
        flops=int(B * C * HW),
        transcendentals=0,
        bytes_accessed=int(2 * B * C * HW * itemsize + B * C * 4),
    )
    out = pl.pallas_call(
        _apply_scale_kernel,
        out_shape=jax.ShapeDtypeStruct((B, C, HW), x_nchw.dtype),
        grid_spec=pltpu.PrefetchScalarGridSpec(
            num_scalar_prefetch=0,
            grid=(B, n_c, n_hw),
            in_specs=[
                pl.BlockSpec((1, c_tile, hw_tile), lambda b, c, t: (b, c, t)),
                pl.BlockSpec((1, c_tile, 1), lambda b, c, t: (b, c, 0)),
            ],
            out_specs=pl.BlockSpec((1, c_tile, hw_tile),
                                   lambda b, c, t: (b, c, t)),
        ),
        compiler_params=pltpu.CompilerParams(
            dimension_semantics=("parallel", "parallel", "parallel"),
            vmem_limit_bytes=_vmem_limit(4 * tile_in + (4 << 20), limit_ceiling),
        ),
        cost_estimate=apply_cost,
    )(x_flat, scale)

    return out.reshape(B, C, H, W)


def channel_attention_ref(x, w1, b1, w2, b2):
    # Pure-JAX reference of the PyTorch forward (NCHW).
    avg = jnp.mean(x, axis=(2, 3))                         # (B, C)
    mx = jnp.max(x, axis=(2, 3))                           # (B, C)

    def mlp(v):
        h = jnp.maximum(v @ w1.T + b1, 0.0)
        return h @ w2.T + b2

    scale = jax.nn.sigmoid(mlp(avg) + mlp(mx))             # (B, C)
    return x * scale[:, :, None, None]


if __name__ == "__main__":
    key = jax.random.PRNGKey(0)
    B, C, ratio = 2, 32, 8
    Cr = C // ratio

    k_x, k_w1, k_b1, k_w2, k_b2, k_x2 = jax.random.split(key, 6)
    # Deterministic synthetic params (1x1 conv weights squeezed to 2D matrices).
    w1 = jax.random.normal(k_w1, (Cr, C), dtype=jnp.float32) * 0.1
    b1 = jax.random.normal(k_b1, (Cr,), dtype=jnp.float32) * 0.1
    w2 = jax.random.normal(k_w2, (C, Cr), dtype=jnp.float32) * 0.1
    b2 = jax.random.normal(k_b2, (C,), dtype=jnp.float32) * 0.1

    # Case 1: lane-aligned spatial size (16*16 = 256) -> fused single-pass path.
    x = jax.random.normal(k_x, (B, C, 16, 16), dtype=jnp.float32)
    out = jax.block_until_ready(channel_attention(x, w1, b1, w2, b2))
    ref = channel_attention_ref(x, w1, b1, w2, b2)
    assert out.shape == ref.shape and out.dtype == ref.dtype
    assert jnp.allclose(out, ref, atol=1e-5, rtol=1e-5)

    # Case 2: ragged spatial size (14*14 = 196) -> fused path with no HBM-side
    # pad/slice and tail-only in-kernel masking.
    x2 = jax.random.normal(k_x2, (B, C, 14, 14), dtype=jnp.float32)
    out2 = jax.block_until_ready(channel_attention(x2, w1, b1, w2, b2))
    ref2 = channel_attention_ref(x2, w1, b1, w2, b2)
    assert out2.shape == ref2.shape and out2.dtype == ref2.dtype
    assert jnp.allclose(out2, ref2, atol=1e-5, rtol=1e-5)

    # Case 3: force the tiled two-pass fallback (C-tiled grid, ragged HW tail,
    # clipped last-block writes in pass 2) against the same reference.
    out3 = jax.block_until_ready(
        channel_attention(x2, w1, b1, w2, b2,
                          single_pass_vmem_cap=0, hw_tile=128, c_tile=16))
    assert jnp.allclose(out3, ref2, atol=1e-5, rtol=1e-5)

    # Case 4: bf16 activations on the fused path (pooling/MLP in f32, multiply
    # in the native dtype).
    xb = x2.astype(jnp.bfloat16)
    out4 = jax.block_until_ready(channel_attention(xb, w1, b1, w2, b2))
    assert out4.shape == x2.shape and out4.dtype == jnp.bfloat16
    ref4 = channel_attention_ref(xb.astype(jnp.float32), w1, b1, w2, b2)
    assert jnp.allclose(out4.astype(jnp.float32), ref4, atol=5e-2, rtol=5e-2)

    print("KERNEL_OK")
</pallas_src>

<mosaic_0001>
module attributes {stable_mosaic.version = 11 : i64} {
  func.func @_channel_attention_fused_kernel(%arg0: i32, %arg1: memref<1x32x256xf32, #tpu.memory_space<vmem>>, %arg2: memref<4x32xf32, #tpu.memory_space<vmem>>, %arg3: memref<4x1xf32, #tpu.memory_space<vmem>>, %arg4: memref<32x4xf32, #tpu.memory_space<vmem>>, %arg5: memref<32x1xf32, #tpu.memory_space<vmem>>, %arg6: memref<1x32x256xf32, #tpu.memory_space<vmem>>) attributes {dimension_semantics = [#tpu.dimension_semantics<parallel>], iteration_bounds = array<i64: 2>, scalar_prefetch = 0 : i64, scratch_operands = 0 : i64, tpu.core_type = #tpu.core_type<tc>, window_params = [{transform_indices = @transform_0, window_bounds = array<i64: 1, 32, 256>}, {pipeline_mode = #tpu.pipeline_mode<synchronous>, transform_indices = @transform_1, window_bounds = array<i64: 4, 32>}, {pipeline_mode = #tpu.pipeline_mode<synchronous>, transform_indices = @transform_2, window_bounds = array<i64: 4, 1>}, {pipeline_mode = #tpu.pipeline_mode<synchronous>, transform_indices = @transform_3, window_bounds = array<i64: 32, 4>}, {pipeline_mode = #tpu.pipeline_mode<synchronous>, transform_indices = @transform_4, window_bounds = array<i64: 32, 1>}, {transform_indices = @transform_5, window_bounds = array<i64: 1, 32, 256>}]} {
    %c0 = arith.constant 0 : index
    %c0_0 = arith.constant 0 : index
    %c0_1 = arith.constant 0 : index
    %0 = vector.load %arg1[%c0, %c0_0, %c0_1] : memref<1x32x256xf32, #tpu.memory_space<vmem>>, vector<1x32x256xf32>
    %1 = vector.shape_cast %0 : vector<1x32x256xf32> to vector<32x256xf32>
    %cst = arith.constant dense<0.000000e+00> : vector<32xf32>
    %2 = vector.multi_reduction <add>, %1, %cst [1] : vector<32x256xf32> to vector<32xf32>
    %3 = vector.shape_cast %2 : vector<32xf32> to vector<32x1xf32>
    %cst_2 = arith.constant dense<0xFF800000> : vector<32xf32>
    %4 = vector.multi_reduction <maximumf>, %1, %cst_2 [1] : vector<32x256xf32> to vector<32xf32>
    %5 = vector.shape_cast %4 : vector<32xf32> to vector<32x1xf32>
    %cst_3 = arith.constant 3.906250e-03 : f32
    %6 = vector.broadcast %cst_3 : f32 to vector<32x1xf32>
    %7 = arith.mulf %3, %6 : vector<32x1xf32>
    %8 = tpu.iota {dimensions = array<i32: 1>} : vector<32x2xi32>
    %c0_i32 = arith.constant 0 : i32
    %9 = vector.broadcast %c0_i32 : i32 to vector<32x2xi32>
    %10 = arith.cmpi eq, %8, %9 : vector<32x2xi32>
    %11 = vector.shape_cast %7 : vector<32x1xf32> to vector<32x1xf32>
    %12 = vector.broadcast %11 : vector<32x1xf32> to vector<32x2xf32>
    %13 = vector.shape_cast %5 : vector<32x1xf32> to vector<32x1xf32>
    %14 = vector.broadcast %13 : vector<32x1xf32> to vector<32x2xf32>
    %15 = arith.select %10, %12, %14 : vector<32x2xi1>, vector<32x2xf32>
    %c0_4 = arith.constant 0 : index
    %c0_5 = arith.constant 0 : index
    %16 = vector.load %arg2[%c0_4, %c0_5] : memref<4x32xf32, #tpu.memory_space<vmem>>, vector<4x32xf32>
    %c0_6 = arith.constant 0 : index
    %c0_7 = arith.constant 0 : index
    %17 = vector.load %arg3[%c0_6, %c0_7] : memref<4x1xf32, #tpu.memory_space<vmem>>, vector<4x1xf32>
    %c0_8 = arith.constant 0 : index
    %c0_9 = arith.constant 0 : index
    %18 = vector.load %arg4[%c0_8, %c0_9] : memref<32x4xf32, #tpu.memory_space<vmem>>, vector<32x4xf32>
    %c0_10 = arith.constant 0 : index
    %c0_11 = arith.constant 0 : index
    %19 = vector.load %arg5[%c0_10, %c0_11] : memref<32x1xf32, #tpu.memory_space<vmem>>, vector<32x1xf32>
    %cst_12 = arith.constant dense<0.000000e+00> : vector<4x2xf32>
    %20 = tpu.matmul %16, %15, %cst_12 {dimension_numbers = #tpu.dot_dimension_numbers<[1], [0], [0], [1], [0, 0, 1, 1], [], []>} : vector<4x32xf32>, vector<32x2xf32>, vector<4x2xf32> -> vector<4x2xf32>
    %21 = vector.broadcast %17 : vector<4x1xf32> to vector<4x2xf32>
    %22 = arith.addf %20, %21 : vector<4x2xf32>
    %cst_13 = arith.constant 0.000000e+00 : f32
    %23 = vector.broadcast %cst_13 : f32 to vector<4x2xf32>
    %24 = arith.maximumf %22, %23 : vector<4x2xf32>
    %cst_14 = arith.constant dense<0.000000e+00> : vector<32x2xf32>
    %25 = tpu.matmul %18, %24, %cst_14 {dimension_numbers = #tpu.dot_dimension_numbers<[1], [0], [0], [1], [0, 0, 1, 1], [], []>} : vector<32x4xf32>, vector<4x2xf32>, vector<32x2xf32> -> vector<32x2xf32>
    %26 = vector.broadcast %19 : vector<32x1xf32> to vector<32x2xf32>
    %27 = arith.addf %25, %26 : vector<32x2xf32>
    %cst_15 = arith.constant dense<0.000000e+00> : vector<32xf32>
    %28 = vector.multi_reduction <add>, %27, %cst_15 [1] : vector<32x2xf32> to vector<32xf32>
    %29 = vector.shape_cast %28 : vector<32xf32> to vector<32x1xf32>
    %30 = arith.negf %29 : vector<32x1xf32>
    %31 = math.exp %30 : vector<32x1xf32>
    %cst_16 = arith.constant 1.000000e+00 : f32
    %32 = vector.broadcast %cst_16 : f32 to vector<32x1xf32>
    %33 = arith.addf %32, %31 : vector<32x1xf32>
    %34 = arith.divf %32, %33 : vector<32x1xf32>
    %35 = vector.broadcast %34 : vector<32x1xf32> to vector<32x256xf32>
    %36 = arith.mulf %1, %35 : vector<32x256xf32>
    %c0_17 = arith.constant 0 : index
    %c0_18 = arith.constant 0 : index
    %c0_19 = arith.constant 0 : index
    %37 = vector.load %arg6[%c0_17, %c0_18, %c0_19] : memref<1x32x256xf32, #tpu.memory_space<vmem>>, vector<1x32x256xf32>
    %38 = vector.shape_cast %37 : vector<1x32x256xf32> to vector<32x256xf32>
    %39 = vector.shape_cast %36 : vector<32x256xf32> to vector<1x32x256xf32>
    tpu.vector_store %arg6[%c0_17, %c0_18, %c0_19], %39 {strides = array<i32>} : memref<1x32x256xf32, #tpu.memory_space<vmem>>, vector<1x32x256xf32>,
    return
  }
  func.func @transform_0(%arg0: i32) -> (i32, i32, i32) {
    %c0_i32 = arith.constant 0 : i32
    %c0_i32_0 = arith.constant 0 : i32
    %c0_i32_1 = arith.constant 0 : i32
    return %arg0, %c0_i32, %c0_i32_0 : i32, i32, i32
  }
  func.func @transform_1(%arg0: i32) -> (i32, i32) {
    %c0_i32 = arith.constant 0 : i32
    %c0_i32_0 = arith.constant 0 : i32
    %c0_i32_1 = arith.constant 0 : i32
    return %c0_i32, %c0_i32_0 : i32, i32
  }
  func.func @transform_2(%arg0: i32) -> (i32, i32) {
    %c0_i32 = arith.constant 0 : i32
    %c0_i32_0 = arith.constant 0 : i32
    %c0_i32_1 = arith.constant 0 : i32
    return %c0_i32, %c0_i32_0 : i32, i32
  }
  func.func @transform_3(%arg0: i32) -> (i32, i32) {
    %c0_i32 = arith.constant 0 : i32
    %c0_i32_0 = arith.constant 0 : i32
    %c0_i32_1 = arith.constant 0 : i32
    return %c0_i32, %c0_i32_0 : i32, i32
  }
  func.func @transform_4(%arg0: i32) -> (i32, i32) {
    %c0_i32 = arith.constant 0 : i32
    %c0_i32_0 = arith.constant 0 : i32
    %c0_i32_1 = arith.constant 0 : i32
    return %c0_i32, %c0_i32_0 : i32, i32
  }
  func.func @transform_5(%arg0: i32) -> (i32, i32, i32) {
    %c0_i32 = arith.constant 0 : i32
    %c0_i32_0 = arith.constant 0 : i32
    %c0_i32_1 = arith.constant 0 : i32
    return %arg0, %c0_i32, %c0_i32_0 : i32, i32, i32
  }
}

</mosaic_0001>

<llo_original>
// kernel: tpu_custom_call.1
$region0: #{tpu_custom_call.1}
  #allocation0 [shape = 'u32[]', space=smem, size = 0x4, offset = 0x4, fixed_abs, tag = 'smem constant byte address 0x4 - core index']
  #allocation1 [shape = 'u32[144,128]{1,0:T(1,128)}', space=vmem, size = 0x12000, scoped, tag = 'internal scratch']
  %s0 = inlined_call_operand.hbm [shape: f32[2,32,256], index: 0, kind: input, shape index: {}]
  %s1 = inlined_call_operand.vmem [shape: f32[4,32], index: 1, kind: input, shape index: {}]
  %s2 = inlined_call_operand.vmem [shape: f32[4,1], index: 2, kind: input, shape index: {}]
  %s3 = inlined_call_operand.vmem [shape: f32[32,4], index: 3, kind: input, shape index: {}]
  %s4 = inlined_call_operand.vmem [shape: f32[32,1], index: 4, kind: input, shape index: {}]
  %s5 = inlined_call_operand.hbm [shape: f32[2,32,256], index: 5, kind: output, shape index: {}]
  %s6 = sld [smem:[#allocation0]]
  $region57: #{tpu_custom_call.1} parent=0
    _
  %s8 = ssub.s32 1, %s6
  %s9 = scalar_select 0, %s8, %s6
  $region1: #{tpu_custom_call.1} parent=0
    #allocation2 [shape = 'u8[65536]{0}', space=vmem, size = 0x10000, scoped, tag = 'input window, operand 0']
    #allocation3 [shape = 's32[2]{0}', space=sflag, size = 0x8, scoped, tag = 'scoped memory for tpu_custom_call.1']
    #allocation4 [shape = 's32[2]{0}', space=sflag, size = 0x8, scoped, tag = 'scoped memory for tpu_custom_call.1']
    #allocation5 [shape = 'u8[65536]{0}', space=vmem, size = 0x10000, scoped, tag = 'output window, operand 0']
    %10 = vsyncpa [#allocation3], 0
    %s11 = scalar_lea.sflag [#allocation3], 1
    %12 = vsyncpa %s11, 0
    %13 = vsyncpa [#allocation4], 0
    %s14 = scalar_lea.sflag [#allocation4], 1
    %15 = vsyncpa %s14, 0
    loop: start=0, step=1, limit=4
    $region2: #{tpu_custom_call.1} parent=1 // loop_pre_header
      _
    $region3: #{tpu_custom_call.1} parent=1 // loop_header
      %s17 = sphi 0, %s21
      %p18 = scmp.ge.s32.totalorder %s17, 4
      %s27 = sphi 0, %s29
      %s30 = sphi 0, %s27
      %s31 = sphi 0, %s30
      %s47 = sphi 0, %s31
      %s51 = sphi 0, %s51
      %s53 = sphi 0, %s51
      %s54 = sphi 0, %s53
      %s68 = sphi 0, %s54
      %s72 = sphi 0, %s72
      %s74 = sphi 0, %s72
      %s75 = sphi 0, %s74
      %s89 = sphi 0, %s75
      %s93 = sphi 0, %s93
      %s95 = sphi 0, %s93
      %s96 = sphi 0, %s95
      %s110 = sphi 0, %s96
      %s114 = sphi 0, %s114
      %s116 = sphi 0, %s114
      %s117 = sphi 0, %s116
      %s131 = sphi 0, %s117
      %s137 = sphi 0, %s139
      %s140 = sphi 0, %s137
      %s141 = sphi 0, %s140
      %s157 = sphi 0, %s141
    $region4: #{tpu_custom_call.1} parent=1 // loop_header_branch
      %20 = sbr.rel (%p18) target = $region8
    $region5: #{tpu_custom_call.1} parent=1 // loop_body
      %s22 = ssub.s32 %s17, 1
      %s23 = ssub.s32 %s17, 2
      %s24 = sadd.s32 %s17, 1
      %s25 = ssub.s32 %s17, %s24
      %p26 = scmp.eq.s32.totalorder %s25, 0
      %s28 = sadd.s32 %s27, 1
      %s29 = scalar_select %p26, %s27, %s28
      %p32 = pneg %p26
      %p33 = scmp.eq.s32.totalorder %s17, 1
      %p34 = por %p32, %p33
      %p35 = scmp.ne.s32.totalorder %s27, %s30
      %p36 = scmp.eq.s32.totalorder %s17, 0
      %p37 = por %p35, %p36
      %p38 = scmp.ne.s32.totalorder %s27, %s30
      %p39 = scmp.eq.s32.totalorder %s22, 1
      %p40 = por %p38, %p39
      %p41 = scmp.ne.s32.totalorder %s30, %s31
      %p42 = scmp.eq.s32.totalorder %s22, 0
      %p43 = por %p41, %p42
      %p44 = scmp.ne.s32.totalorder %s30, %s31
      %p45 = scmp.eq.s32.totalorder %s23, 1
      %p46 = por %p44, %p45
      %p48 = scmp.ne.s32.totalorder %s31, %s47
      %p49 = scmp.eq.s32.totalorder %s23, 0
      %p50 = por %p48, %p49
      %s52 = sadd.s32 %s51, 1
      %p55 = scmp.eq.s32.totalorder %s17, 1
      %p56 = scmp.ne.s32.totalorder %s51, %s53
      %p57 = scmp.eq.s32.totalorder %s17, 0
      %p58 = por %p56, %p57
      %p59 = scmp.ne.s32.totalorder %s51, %s53
      %p60 = scmp.eq.s32.totalorder %s22, 1
      %p61 = por %p59, %p60
      %p62 = scmp.ne.s32.totalorder %s53, %s54
      %p63 = scmp.eq.s32.totalorder %s22, 0
      %p64 = por %p62, %p63
      %p65 = scmp.ne.s32.totalorder %s53, %s54
      %p66 = scmp.eq.s32.totalorder %s23, 1
      %p67 = por %p65, %p66
      %p69 = scmp.ne.s32.totalorder %s54, %s68
      %p70 = scmp.eq.s32.totalorder %s23, 0
      %p71 = por %p69, %p70
      %s73 = sadd.s32 %s72, 1
      %p76 = scmp.eq.s32.totalorder %s17, 1
      %p77 = scmp.ne.s32.totalorder %s72, %s74
      %p78 = scmp.eq.s32.totalorder %s17, 0
      %p79 = por %p77, %p78
      %p80 = scmp.ne.s32.totalorder %s72, %s74
      %p81 = scmp.eq.s32.totalorder %s22, 1
      %p82 = por %p80, %p81
      %p83 = scmp.ne.s32.totalorder %s74, %s75
      %p84 = scmp.eq.s32.totalorder %s22, 0
      %p85 = por %p83, %p84
      %p86 = scmp.ne.s32.totalorder %s74, %s75
      %p87 = scmp.eq.s32.totalorder %s23, 1
      %p88 = por %p86, %p87
      %p90 = scmp.ne.s32.totalorder %s75, %s89
      %p91 = scmp.eq.s32.totalorder %s23, 0
      %p92 = por %p90, %p91
      %s94 = sadd.s32 %s93, 1
      %p97 = scmp.eq.s32.totalorder %s17, 1
      %p98 = scmp.ne.s32.totalorder %s93, %s95
      %p99 = scmp.eq.s32.totalorder %s17, 0
      %p100 = por %p98, %p99
      %p101 = scmp.ne.s32.totalorder %s93, %s95
      %p102 = scmp.eq.s32.totalorder %s22, 1
      %p103 = por %p101, %p102
      %p104 = scmp.ne.s32.totalorder %s95, %s96
      %p105 = scmp.eq.s32.totalorder %s22, 0
      %p106 = por %p104, %p105
      %p107 = scmp.ne.s32.totalorder %s95, %s96
      %p108 = scmp.eq.s32.totalorder %s23, 1
      %p109 = por %p107, %p108
      %p111 = scmp.ne.s32.totalorder %s96, %s110
      %p112 = scmp.eq.s32.totalorder %s23, 0
      %p113 = por %p111, %p112
      %s115 = sadd.s32 %s114, 1
      %p118 = scmp.eq.s32.totalorder %s17, 1
      %p119 = scmp.ne.s32.totalorder %s114, %s116
      %p120 = scmp.eq.s32.totalorder %s17, 0
      %p121 = por %p119, %p120
      %p122 = scmp.ne.s32.totalorder %s114, %s116
      %p123 = scmp.eq.s32.totalorder %s22, 1
      %p124 = por %p122, %p123
      %p125 = scmp.ne.s32.totalorder %s116, %s117
      %p126 = scmp.eq.s32.totalorder %s22, 0
      %p127 = por %p125, %p126
      %p128 = scmp.ne.s32.totalorder %s116, %s117
      %p129 = scmp.eq.s32.totalorder %s23, 1
      %p130 = por %p128, %p129
      %p132 = scmp.ne.s32.totalorder %s117, %s131
      %p133 = scmp.eq.s32.totalorder %s23, 0
      %p134 = por %p132, %p133
      %s135 = ssub.s32 %s17, %s24
      %p136 = scmp.eq.s32.totalorder %s135, 0
      %s138 = sadd.s32 %s137, 1
      %s139 = scalar_select %p136, %s137, %s138
      %p142 = pneg %p136
      %p143 = scmp.eq.s32.totalorder %s17, 1
      %p144 = por %p142, %p143
      %p145 = scmp.ne.s32.totalorder %s137, %s140
      %p146 = scmp.eq.s32.totalorder %s17, 0
      %p147 = por %p145, %p146
      %p148 = scmp.ne.s32.totalorder %s137, %s140
      %p149 = scmp.eq.s32.totalorder %s22, 1
      %p150 = por %p148, %p149
      %p151 = scmp.ne.s32.totalorder %s140, %s141
      %p152 = scmp.eq.s32.totalorder %s22, 0
      %p153 = por %p151, %p152
      %p154 = scmp.ne.s32.totalorder %s140, %s141
      %p155 = scmp.eq.s32.totalorder %s23, 1
      %p156 = por %p154, %p155
      %p158 = scmp.ne.s32.totalorder %s141, %s157
      %p159 = scmp.eq.s32.totalorder %s23, 0
      %p160 = por %p158, %p159
      %p161 = scmp.le.s32.totalorder 1, %s17
      %p162 = scmp.lt.s32.totalorder %s17, 3
      %p163 = pnand %p161, %p162
      %p164 = pneg %p163
      // Predicated region
      $region9: #{tpu_custom_call.1} parent=5 // pred_check
        _
      $region10: #{tpu_custom_call.1} parent=5 // pred_check_branch
        %166 = sbr.rel (%p163) target = $region12
      $region11: #{tpu_custom_call.1} parent=5 // pred_region
        %s167 = ssub.s32 %s17, 1
        // Predicated region
        $region13: #{tpu_custom_call.1} parent=11 // pred_check
          %p168 = pneg %p64
        $region14: #{tpu_custom_call.1} parent=11 // pred_check_branch
          %170 = sbr.rel (%p168) target = $region16
        $region15: #{tpu_custom_call.1} parent=11 // pred_region
          _
        $region16: #{tpu_custom_call.1} parent=11 // pred_fallthru
          _
        // Predicated region
        $region17: #{tpu_custom_call.1} parent=11 // pred_check
          %p171 = pneg %p85
        $region18: #{tpu_custom_call.1} parent=11 // pred_check_branch
          %173 = sbr.rel (%p171) target = $region20
        $region19: #{tpu_custom_call.1} parent=11 // pred_region
          _
        $region20: #{tpu_custom_call.1} parent=11 // pred_fallthru
          _
        // Predicated region
        $region21: #{tpu_custom_call.1} parent=11 // pred_check
          %p174 = pneg %p106
        $region22: #{tpu_custom_call.1} parent=11 // pred_check_branch
          %176 = sbr.rel (%p174) target = $region24
        $region23: #{tpu_custom_call.1} parent=11 // pred_region
          _
        $region24: #{tpu_custom_call.1} parent=11 // pred_fallthru
          _
        // Predicated region
        $region25: #{tpu_custom_call.1} parent=11 // pred_check
          %p177 = pneg %p127
        $region26: #{tpu_custom_call.1} parent=11 // pred_check_branch
          %179 = sbr.rel (%p177) target = $region28
        $region27: #{tpu_custom_call.1} parent=11 // pred_region
          _
        $region28: #{tpu_custom_call.1} parent=11 // pred_fallthru
          _
      $region12: #{tpu_custom_call.1} parent=5 // pred_fallthru
        _
      %p180 = scmp.lt.s32.totalorder %s17, 2
      // Predicated region
      $region29: #{tpu_custom_call.1} parent=5 // pred_check
        %p181 = pneg %p180
      $region30: #{tpu_custom_call.1} parent=5 // pred_check_branch
        %183 = sbr.rel (%p181) target = $region32
      $region31: #{tpu_custom_call.1} parent=5 // pred_region
        // Predicated region
        $region33: #{tpu_custom_call.1} parent=31 // pred_check
          %p184 = pneg %p37
        $region34: #{tpu_custom_call.1} parent=31 // pred_check_branch
          %186 = sbr.rel (%p184) target = $region36
        $region35: #{tpu_custom_call.1} parent=31 // pred_region
          %s187 = sand.u32 %s27, 1
          %s188 = scalar_lea.sflag [#allocation3], %s187
          %s189 = sand.u32 %s27, 1
          %s190 = smul.addr %s189, 64
          %s191 = scalar_lea.vmem [#allocation2], %s190
          %s193 = ssub.s32 1024, 1024
          %194 = vsyncadd %s188, %s193
          %s195 = smul.addr %s17, 8
          %s196 = smul.addr %s195, 128
          %s197 = scalar_lea.hbm %s0, %s196
          %s198 = sshll.u32 %s191, 4
          %s199 = int_to_ptr.vmem [resolvable:$true] %s198
          %204 = dma.hbm_to_vmem [thread:$0]  %s197, 1024, %s199, %s188, 256, 256, 16
        $region36: #{tpu_custom_call.1} parent=31 // pred_fallthru
          _
      $region32: #{tpu_custom_call.1} parent=5 // pred_fallthru
        _
      %p205 = scmp.le.s32.totalorder 1, %s17
      %p206 = scmp.lt.s32.totalorder %s17, 3
      %p207 = pnand %p205, %p206
      %p208 = pneg %p207
      // Predicated region
      $region37: #{tpu_custom_call.1} parent=5 // pred_check
        _
      $region38: #{tpu_custom_call.1} parent=5 // pred_check_branch
        %210 = sbr.rel (%p207) target = $region40
      $region39: #{tpu_custom_call.1} parent=5 // pred_region
        %s211 = ssub.s32 %s17, 1
        %s212 = sand.u32 %s30, 1
        %s213 = scalar_lea.sflag [#allocation3], %s212
        %s214 = sand.u32 %s30, 1
        %s215 = smul.addr %s214, 64
        %s216 = scalar_lea.vmem [#allocation2], %s215
        // Predicated region
        $region41: #{tpu_custom_call.1} parent=39 // pred_check
          %p217 = pneg %p43
        $region42: #{tpu_custom_call.1} parent=39 // pred_check_branch
          %219 = sbr.rel (%p217) target = $region44
        $region43: #{tpu_custom_call.1} parent=39 // pred_region
          %220 = dma.done %s213, 1024
        $region44: #{tpu_custom_call.1} parent=39 // pred_fallthru
          _
        %s221 = sand.u32 %s30, 1
        %s222 = scalar_lea.sflag [#allocation3], %s221
        %s223 = sand.u32 %s30, 1
        %s224 = smul.addr %s223, 64
        %s225 = scalar_lea.vmem [#allocation2], %s224
        %p226 = pneg %p43
        %p227 = pneg %p40
        %p228 = pneg %p64
        %p229 = pneg %p61
        %p230 = pneg %p85
        %p231 = pneg %p82
        %p232 = pneg %p106
        %p233 = pneg %p103
        %p234 = pneg %p127
        %p235 = pneg %p124
        %p236 = pneg %p153
        %p237 = pneg %p150
        %s238 = sand.u32 %s140, 1
        %s239 = scalar_lea.sflag [#allocation4], %s238
        %s240 = sand.u32 %s140, 1
        %s241 = smul.addr %s240, 64
        %s242 = scalar_lea.vmem [#allocation5], %s241
        %v243 = vld [vmem:[%s216] sm:$0xff]
        %v244 = vld [vmem:[%s216 + $0x8] sm:$0xff]
        %v245 = vld [vmem:[%s216 + $0x10] sm:$0xff]
        %v246 = vld [vmem:[%s216 + $0x18] sm:$0xff]
        %v247 = vld [vmem:[%s216 + $0x20] sm:$0xff]
        %v248 = vld [vmem:[%s216 + $0x28] sm:$0xff]
        %v249 = vld [vmem:[%s216 + $0x30] sm:$0xff]
        %v250 = vld [vmem:[%s216 + $0x38] sm:$0xff]
        %v251 = vadd.f32 %v243, %v244
        %252 = vadd.xlane.f32.xlu0 %v251
        %v253 = vpop.xlane.xlu0 %252
        %v254 = vadd.f32 %v245, %v246
        %255 = vadd.xlane.f32.xlu0 %v254
        %v256 = vpop.xlane.xlu0 %255
        %v257 = vadd.f32 %v247, %v248
        %258 = vadd.xlane.f32.xlu0 %v257
        %v259 = vpop.xlane.xlu0 %258
        %v260 = vadd.f32 %v249, %v250
        %261 = vadd.xlane.f32.xlu0 %v260
        %v262 = vpop.xlane.xlu0 %261
        %v263 = vmax.f32 %v243, %v244
        %264 = vmax.xlane.f32.xlu0 %v263
        %v265 = vpop.xlane.xlu0 %264
        %v266 = vmax.f32 %v245, %v246
        %267 = vmax.xlane.f32.xlu0 %v266
        %v268 = vpop.xlane.xlu0 %267
        %v269 = vmax.f32 %v247, %v248
        %270 = vmax.xlane.f32.xlu0 %v269
        %v271 = vpop.xlane.xlu0 %270
        %v272 = vmax.f32 %v249, %v250
        %273 = vmax.xlane.f32.xlu0 %v272
        %v274 = vpop.xlane.xlu0 %273
        %v275 = vmul.f32 %v253, 0.00390625
        %v276 = vmul.f32 %v256, 0.00390625
        %v277 = vmul.f32 %v259, 0.00390625
        %v278 = vmul.f32 %v262, 0.00390625
        %v279 = vlaneseq
        %v280 = vand.u32 %v279, 127
        %vm281 = vcmp.eq.s32.totalorder %v280, 0
        %v282 = vsel %vm281, %v275, %v265
        %v283 = vsel %vm281, %v276, %v268
        %v284 = vsel %vm281, %v277, %v271
        %v285 = vsel %vm281, %v278, %v274
        %v286 = vld [vmem:[%s1] sm:$0xf]
        %v287 = vld [vmem:[%s2] sm:$0xf]
        %v288 = vld [vmem:[%s3] sm:$0xff]
        %v289 = vld [vmem:[%s3 + $0x8] sm:$0xff]
        %v290 = vld [vmem:[%s3 + $0x10] sm:$0xff]
        %v291 = vld [vmem:[%s3 + $0x18] sm:$0xff]
        %v292 = vld [vmem:[%s4] sm:$0xff]
        %v293 = vld [vmem:[%s4 + $0x8] sm:$0xff]
        %v294 = vld [vmem:[%s4 + $0x10] sm:$0xff]
        %v295 = vld [vmem:[%s4 + $0x18] sm:$0xff]
        %297 = vset.pattern.permute.xlu0 0
        %298 = vperm.xlu0 %297, %v287
        %v299 = vpop.permute.xlu0 %298
        %vm301 = vcmask 261120
        %v303 = vsel %vm301, %v286, 0
        %305 = vmatprep.subr.mxu0 0.0
        %306 = vmatpush1.msra.mxu0 %v282
        %307 = vmatprep.subr.mxu0 0.0
        %308 = vmatpush1.msra.mxu0 %v283
        %309 = vmatprep.subr.mxu0 0.0
        %310 = vmatpush1.msra.mxu0 %v284
        %311 = vmatprep.subr.mxu0 0.0
        %312 = vmatpush1.msra.mxu0 %v285
        %313 = vmatprep.subr.mxu0 0.0
        %314 = vmatpush1.msra.mxu0 0.0
        %315 = vmatprep.subr.mxu0 0.0
        %316 = vmatpush1.msra.mxu0 0.0
        %317 = vmatprep.subr.mxu0 0.0
        %318 = vmatpush1.msra.mxu0 0.0
        %319 = vmatprep.subr.mxu0 0.0
        %320 = vmatpush1.msra.mxu0 0.0
        %321 = vmatprep.subr.mxu0 0.0
        %322 = vmatpush1.msra.mxu0 0.0
        %323 = vmatprep.subr.mxu0 0.0
        %324 = vmatpush1.msra.mxu0 0.0
        %325 = vmatprep.subr.mxu0 0.0
        %326 = vmatpush1.msra.mxu0 0.0
        %327 = vmatprep.subr.mxu0 0.0
        %328 = vmatpush1.msra.mxu0 0.0
        %329 = vmatprep.subr.mxu0 0.0
        %330 = vmatpush1.msra.mxu0 0.0
        %331 = vmatprep.subr.mxu0 0.0
        %332 = vmatpush1.msra.mxu0 0.0
        %333 = vmatprep.subr.mxu0 0.0
        %334 = vmatpush1.msra.mxu0 0.0
        %335 = vmatprep.subr.mxu0 0.0
        %336 = vmatpush1.msra.mxu0 0.0
        %337 = vmatprep.subr.mxu0 0.0
        %338 = vmatpush1.msra.mxu0 0.0
        %339 = vmatprep.subr.mxu0 0.0
        %340 = vmatpush1.msra.mxu0 0.0
        %341 = vmatprep.subr.mxu0 0.0
        %342 = vmatpush1.msra.mxu0 0.0
        %343 = vmatprep.subr.mxu0 0.0
        %344 = vmatpush1.msra.mxu0 0.0
        %345 = vmatprep.subr.mxu0 0.0
        %346 = vmatpush1.msra.mxu0 0.0
        %347 = vmatprep.subr.mxu0 0.0
        %348 = vmatpush1.msra.mxu0 0.0
        %349 = vmatprep.subr.mxu0 0.0
        %350 = vmatpush1.msra.mxu0 0.0
        %351 = vmatprep.subr.mxu0 0.0
        %352 = vmatpush1.msra.mxu0 0.0
        %353 = vmatprep.subr.mxu0 0.0
        %354 = vmatpush1.msra.mxu0 0.0
        %355 = vmatprep.subr.mxu0 0.0
        %356 = vmatpush1.msra.mxu0 0.0
        %357 = vmatprep.subr.mxu0 0.0
        %358 = vmatpush1.msra.mxu0 0.0
        %359 = vmatprep.subr.mxu0 0.0
        %360 = vmatpush1.msra.mxu0 0.0
        %361 = vmatprep.subr.mxu0 0.0
        %362 = vmatpush1.msra.mxu0 0.0
        %363 = vmatprep.subr.mxu0 0.0
        %364 = vmatpush1.msra.mxu0 0.0
        %365 = vmatprep.subr.mxu0 0.0
        %366 = vmatpush1.msra.mxu0 0.0
        %367 = vmatprep.subr.mxu0 0.0
        %368 = vmatpush1.msra.mxu0 0.0
        %369 = vmatprep.mubr.f32.mxu0 0.0
        %370 = vmatmul.mubr.f32.gmra.mrb[0].mxu0 %v303
        %v371 = vpop.f32.mrb[0].mxu0
        %v372 = vadd.f32 %v299, %v371
        %v373 = vpop.f32.mrb[0].mxu0
        %374 = vdwg.mxu0
        %v375 = vmax.f32 %v372, 0.0
        %377 = vset.pattern.permute.xlu0 0
        %378 = vperm.xlu0 %377, %v292
        %v379 = vpop.permute.xlu0 %378
        %382 = vset.pattern.permute.xlu0 0
        %383 = vperm.xlu0 %382, %v293
        %v384 = vpop.permute.xlu0 %383
        %387 = vset.pattern.permute.xlu0 0
        %388 = vperm.xlu0 %387, %v294
        %v389 = vpop.permute.xlu0 %388
        %392 = vset.pattern.permute.xlu0 0
        %393 = vperm.xlu0 %392, %v295
        %v394 = vpop.permute.xlu0 %393
        %vm396 = vcmask 31744
        %v398 = vsel %vm396, %v288, 0
        %v401 = vsel %vm396, %v289, 0
        %v404 = vsel %vm396, %v290, 0
        %v407 = vsel %vm396, %v291, 0
        %vm409 = vcmask 1043456
        %v411 = vsel %vm409, %v375, 0
        %413 = vmatprep.subr.mxu0 0.0
        %414 = vmatpush1.msra.mxu0 %v411
        %415 = vmatprep.subr.mxu0 0.0
        %416 = vmatpush1.msra.mxu0 0.0
        %417 = vmatprep.subr.mxu0 0.0
        %418 = vmatpush1.msra.mxu0 0.0
        %419 = vmatprep.subr.mxu0 0.0
        %420 = vmatpush1.msra.mxu0 0.0
        %421 = vmatprep.subr.mxu0 0.0
        %422 = vmatpush1.msra.mxu0 0.0
        %423 = vmatprep.subr.mxu0 0.0
        %424 = vmatpush1.msra.mxu0 0.0
        %425 = vmatprep.subr.mxu0 0.0
        %426 = vmatpush1.msra.mxu0 0.0
        %427 = vmatprep.subr.mxu0 0.0
        %428 = vmatpush1.msra.mxu0 0.0
        %429 = vmatprep.subr.mxu0 0.0
        %430 = vmatpush1.msra.mxu0 0.0
        %431 = vmatprep.subr.mxu0 0.0
        %432 = vmatpush1.msra.mxu0 0.0
        %433 = vmatprep.subr.mxu0 0.0
        %434 = vmatpush1.msra.mxu0 0.0
        %435 = vmatprep.subr.mxu0 0.0
        %436 = vmatpush1.msra.mxu0 0.0
        %437 = vmatprep.subr.mxu0 0.0
        %438 = vmatpush1.msra.mxu0 0.0
        %439 = vmatprep.subr.mxu0 0.0
        %440 = vmatpush1.msra.mxu0 0.0
        %441 = vmatprep.subr.mxu0 0.0
        %442 = vmatpush1.msra.mxu0 0.0
        %443 = vmatprep.subr.mxu0 0.0
        %444 = vmatpush1.msra.mxu0 0.0
        %445 = vmatprep.subr.mxu0 0.0
        %446 = vmatpush1.msra.mxu0 0.0
        %447 = vmatprep.subr.mxu0 0.0
        %448 = vmatpush1.msra.mxu0 0.0
        %449 = vmatprep.subr.mxu0 0.0
        %450 = vmatpush1.msra.mxu0 0.0
        %451 = vmatprep.subr.mxu0 0.0
        %452 = vmatpush1.msra.mxu0 0.0
        %453 = vmatprep.subr.mxu0 0.0
        %454 = vmatpush1.msra.mxu0 0.0
        %455 = vmatprep.subr.mxu0 0.0
        %456 = vmatpush1.msra.mxu0 0.0
        %457 = vmatprep.subr.mxu0 0.0
        %458 = vmatpush1.msra.mxu0 0.0
        %459 = vmatprep.subr.mxu0 0.0
        %460 = vmatpush1.msra.mxu0 0.0
        %461 = vmatprep.subr.mxu0 0.0
        %462 = vmatpush1.msra.mxu0 0.0
        %463 = vmatprep.subr.mxu0 0.0
        %464 = vmatpush1.msra.mxu0 0.0
        %465 = vmatprep.subr.mxu0 0.0
        %466 = vmatpush1.msra.mxu0 0.0
        %467 = vmatprep.subr.mxu0 0.0
        %468 = vmatpush1.msra.mxu0 0.0
        %469 = vmatprep.subr.mxu0 0.0
        %470 = vmatpush1.msra.mxu0 0.0
        %471 = vmatprep.subr.mxu0 0.0
        %472 = vmatpush1.msra.mxu0 0.0
        %473 = vmatprep.subr.mxu0 0.0
        %474 = vmatpush1.msra.mxu0 0.0
        %475 = vmatprep.subr.mxu0 0.0
        %476 = vmatpush1.msra.mxu0 0.0
        %477 = vmatprep.mubr.f32.mxu0 0.0
        %478 = vmatmul.mubr.f32.gmra.mrb[0].mxu0 %v398
        %v479 = vpop.f32.mrb[0].mxu0
        %v480 = vadd.f32 %v379, %v479
        %v481 = vpop.f32.mrb[0].mxu0
        %482 = vmatprep.mubr.f32.mxu0 0.0
        %483 = vmatmul.mubr.f32.gmra.mrb[0].mxu0 %v401
        %v484 = vpop.f32.mrb[0].mxu0
        %v485 = vadd.f32 %v384, %v484
        %v486 = vpop.f32.mrb[0].mxu0
        %487 = vmatprep.mubr.f32.mxu0 0.0
        %488 = vmatmul.mubr.f32.gmra.mrb[0].mxu0 %v404
        %v489 = vpop.f32.mrb[0].mxu0
        %v490 = vadd.f32 %v389, %v489
        %v491 = vpop.f32.mrb[0].mxu0
        %492 = vmatprep.mubr.f32.mxu0 0.0
        %493 = vmatmul.mubr.f32.gmra.mrb[0].mxu0 %v407
        %v494 = vpop.f32.mrb[0].mxu0
        %v495 = vadd.f32 %v394, %v494
        %v496 = vpop.f32.mrb[0].mxu0
        %497 = vdwg.mxu0
        %vm498 = vcmask 15360
        %v499 = vsel %vm498, %v480, 0.0
        %500 = vadd.xlane.f32.xlu0 %v499
        %v501 = vpop.xlane.xlu0 %500
        %v502 = vsel %vm498, %v485, 0.0
        %503 = vadd.xlane.f32.xlu0 %v502
        %v504 = vpop.xlane.xlu0 %503
        %v505 = vsel %vm498, %v490, 0.0
        %506 = vadd.xlane.f32.xlu0 %v505
        %v507 = vpop.xlane.xlu0 %506
        %v508 = vsel %vm498, %v495, 0.0
        %509 = vadd.xlane.f32.xlu0 %v508
        %v510 = vpop.xlane.xlu0 %509
        %v511 = vxor.u32 %v501, 2147483648
        %v512 = vxor.u32 %v504, 2147483648
        %v513 = vxor.u32 %v507, 2147483648
        %v514 = vxor.u32 %v510, 2147483648
        %v515 = vmul.f32 %v511, 1.442695
        %v516 = vpow.pop %v515
        %v517 = vmul.f32 %v512, 1.442695
        %v518 = vpow.pop %v517
        %v519 = vmul.f32 %v513, 1.442695
        %v520 = vpow.pop %v519
        %v521 = vmul.f32 %v514, 1.442695
        %v522 = vpow.pop %v521
        %v523 = vadd.f32 %v516, 1.0
        %v524 = vadd.f32 %v518, 1.0
        %v525 = vadd.f32 %v520, 1.0
        %v526 = vadd.f32 %v522, 1.0
        %v527 = vrcp.pop %v523
        %v528 = vmul.f32 1.0, %v527
        %v529 = vrcp.pop %v524
        %v530 = vmul.f32 1.0, %v529
        %v531 = vrcp.pop %v525
        %v532 = vmul.f32 1.0, %v531
        %v533 = vrcp.pop %v526
        %v534 = vmul.f32 1.0, %v533
        %v535 = vmul.f32 %v243, %v528
        %v536 = vmul.f32 %v244, %v528
        %v537 = vmul.f32 %v245, %v530
        %v538 = vmul.f32 %v246, %v530
        %v539 = vmul.f32 %v247, %v532
        %v540 = vmul.f32 %v248, %v532
        %v541 = vmul.f32 %v249, %v534
        %v542 = vmul.f32 %v250, %v534
        %543 = vst [vmem:[%s242] sm:$0xff] %v535
        %544 = vst [vmem:[%s242 + $0x8] sm:$0xff] %v536
        %545 = vst [vmem:[%s242 + $0x10] sm:$0xff] %v537
        %546 = vst [vmem:[%s242 + $0x18] sm:$0xff] %v538
        %547 = vst [vmem:[%s242 + $0x20] sm:$0xff] %v539
        %548 = vst [vmem:[%s242 + $0x28] sm:$0xff] %v540
        %549 = vst [vmem:[%s242 + $0x30] sm:$0xff] %v541
        %550 = vst [vmem:[%s242 + $0x38] sm:$0xff] %v542
        %s551 = sand.u32 %s140, 1
        %s552 = scalar_lea.sflag [#allocation4], %s551
        %s553 = sand.u32 %s140, 1
        %s554 = smul.addr %s553, 64
        %s555 = scalar_lea.vmem [#allocation5], %s554
        // Predicated region
        $region45: #{tpu_custom_call.1} parent=39 // pred_check
          %p556 = pneg %p150
        $region46: #{tpu_custom_call.1} parent=39 // pred_check_branch
          %558 = sbr.rel (%p556) target = $region48
        $region47: #{tpu_custom_call.1} parent=39 // pred_region
          %s560 = ssub.s32 1024, 1024
          %561 = vsyncadd %s552, %s560
          %s562 = smul.addr %s22, 8
          %s563 = smul.addr %s562, 128
          %s564 = scalar_lea.hbm %s5, %s563
          %s565 = sshll.u32 %s555, 4
          %s566 = int_to_ptr.vmem [resolvable:$true] %s565
          %571 = dma.vmem_to_hbm [thread:$0]  %s566, 1024, %s564, %s552, 256, 256, 16
        $region48: #{tpu_custom_call.1} parent=39 // pred_fallthru
          _
      $region40: #{tpu_custom_call.1} parent=5 // pred_fallthru
        _
      %p572 = scmp.le.s32.totalorder 2, %s17
      // Predicated region
      $region49: #{tpu_custom_call.1} parent=5 // pred_check
        %p573 = pneg %p572
      $region50: #{tpu_custom_call.1} parent=5 // pred_check_branch
        %575 = sbr.rel (%p573) target = $region52
      $region51: #{tpu_custom_call.1} parent=5 // pred_region
        %s576 = ssub.s32 %s17, 2
        // Predicated region
        $region53: #{tpu_custom_call.1} parent=51 // pred_check
          %p577 = pneg %p156
        $region54: #{tpu_custom_call.1} parent=51 // pred_check_branch
          %579 = sbr.rel (%p577) target = $region56
        $region55: #{tpu_custom_call.1} parent=51 // pred_region
          %s580 = sand.u32 %s141, 1
          %s581 = scalar_lea.sflag [#allocation4], %s580
          %s582 = sand.u32 %s141, 1
          %s583 = smul.addr %s582, 64
          %s584 = scalar_lea.vmem [#allocation5], %s583
          %585 = dma.done %s581, 1024
        $region56: #{tpu_custom_call.1} parent=51 // pred_fallthru
          _
      $region52: #{tpu_custom_call.1} parent=5 // pred_fallthru
        _
    $region6: #{tpu_custom_call.1} parent=1 // loop_footer
      %s21 = sadd.s32 1, %s17
    $region7: #{tpu_custom_call.1} parent=1 // loop_footer_branch
      %16 = sbr.rel target = $region3
    $region8: #{tpu_custom_call.1} parent=1 // loop_exit
      _
    %586 = vsyncpa [#allocation3], 1
    %s587 = scalar_lea.sflag [#allocation3], 1
    %588 = vsyncpa %s587, 1
    %589 = vsyncpa [#allocation4], 1
    %s590 = scalar_lea.sflag [#allocation4], 1
    %591 = vsyncpa %s590, 1

</llo_original>
